<compile_context>
chip_gen: v7x
topology: tpu7x:2x2x1
jax: 0.10.0
libtpu: 0.0.40
codegen_flags: <defaults>
</compile_context>

<pallas_src>
import functools
import math

import jax
import jax.numpy as jnp
from jax.experimental import pallas as pl
from jax.experimental.pallas import tpu as pltpu


def _gap_kernel_single(x_ref, o_ref, *, inv_spatial):
    """Whole spatial extent in one tile: reduce, scale, store."""
    x = x_ref[...].astype(jnp.float32)
    o_ref[...] = (jnp.sum(x, axis=-1, keepdims=True) * inv_spatial).astype(o_ref.dtype)


def _gap_kernel_tiled(x_ref, o_ref, acc_ref, *, spatial, ts, inv_spatial):
    """Row-wise mean over the lane axis, tiled over k = program_id(1)."""
    k = pl.program_id(1)
    nk = pl.num_programs(1)

    # Init the f32 accumulator at the start of each row-tile's reduction.
    @pl.when(k == 0)
    def _():
        acc_ref[...] = jnp.zeros_like(acc_ref)

    x = x_ref[...].astype(jnp.float32)

    # Mask the spatial tail (only emitted when TS does not divide spatial);
    # padded lanes of the last block contain undefined data.
    if spatial % ts != 0:
        col = jax.lax.broadcasted_iota(jnp.int32, x.shape, dimension=1) + k * ts
        x = jnp.where(col < spatial, x, 0.0)

    acc_ref[...] += jnp.sum(x, axis=-1, keepdims=True)

    # Finalize: scale by 1/spatial, cast back to the input dtype, store.
    @pl.when(k == nk - 1)
    def _():
        o_ref[...] = (acc_ref[...] * inv_spatial).astype(o_ref.dtype)


def global_average_pool(x: jax.Array, *, tm: int | None = None,
                        ts: int | None = None,
                        vmem_limit_bytes: int = 32 * 1024 * 1024) -> jax.Array:
    """Equivalent of torch.mean(x, dim=list(range(2, x.ndim)), keepdim=True)."""
    assert x.ndim >= 3, "expects (N, C, spatial...)"
    n, c = x.shape[0], x.shape[1]
    spatial_dims = x.shape[2:]
    spatial = int(math.prod(spatial_dims))
    rows = n * c

    x2d = x.reshape(rows, spatial)
    dtype_bytes = jnp.dtype(x.dtype).itemsize
    inv_spatial = 1.0 / spatial

    # ~4 MiB per input buffer; Pallas double-buffers it (~8 MiB total), which
    # leaves ample headroom inside the 32 MiB scoped-VMEM limit on every chip.
    budget_bytes = 4 * 1024 * 1024

    # --- Tile selection -------------------------------------------------
    if tm is None:
        if spatial * dtype_bytes * 8 <= budget_bytes:
            # Whole spatial extent fits: maximize the row tile (multiple of 8).
            tm = (budget_bytes // (spatial * dtype_bytes)) // 8 * 8
            tm = max(8, min(tm, 512))
        else:
            tm = 512
        if rows <= tm:
            tm = rows

    if ts is None:
        max_ts = max(128, budget_bytes // max(1, tm * dtype_bytes))
        ts = spatial if spatial <= max_ts else (max_ts // 128) * 128

    compiler_params_1d = pltpu.CompilerParams(
        dimension_semantics=("parallel",),
        vmem_limit_bytes=vmem_limit_bytes,
    )
    compiler_params_2d = pltpu.CompilerParams(
        dimension_semantics=("parallel", "arbitrary"),
        vmem_limit_bytes=vmem_limit_bytes,
    )

    if ts >= spatial:
        # Fast path: no reduction axis in the grid, no scratch accumulator.
        out2d = pl.pallas_call(
            functools.partial(_gap_kernel_single, inv_spatial=inv_spatial),
            out_shape=jax.ShapeDtypeStruct((rows, 1), x.dtype),
            grid_spec=pltpu.PrefetchScalarGridSpec(
                num_scalar_prefetch=0,
                grid=(pl.cdiv(rows, tm),),
                in_specs=[pl.BlockSpec((tm, spatial), lambda i: (i, 0))],
                out_specs=pl.BlockSpec((tm, 1), lambda i: (i, 0)),
            ),
            compiler_params=compiler_params_1d,
        )(x2d)
    else:
        # Tiled reduction over the spatial axis with an f32 VMEM accumulator.
        out2d = pl.pallas_call(
            functools.partial(_gap_kernel_tiled, spatial=spatial, ts=ts,
                              inv_spatial=inv_spatial),
            out_shape=jax.ShapeDtypeStruct((rows, 1), x.dtype),
            grid_spec=pltpu.PrefetchScalarGridSpec(
                num_scalar_prefetch=0,
                grid=(pl.cdiv(rows, tm), pl.cdiv(spatial, ts)),
                in_specs=[pl.BlockSpec((tm, ts), lambda i, k: (i, k))],
                out_specs=pl.BlockSpec((tm, 1), lambda i, k: (i, 0)),
                scratch_shapes=[pltpu.VMEM((tm, 1), jnp.float32)],
            ),
            compiler_params=compiler_params_2d,
        )(x2d)

    # keepdim=True over all spatial axes -> trailing 1s.
    return out2d.reshape((n, c) + (1,) * len(spatial_dims))


if __name__ == "__main__":
    # Small NCHW input consistent with GlobalAveragePool usage.
    x = jax.random.normal(jax.random.PRNGKey(0), (2, 4, 16, 16), dtype=jnp.float32)
    out = global_average_pool(x)
    jax.block_until_ready(out)
    ref = jnp.mean(x, axis=(2, 3), keepdims=True)
    assert out.shape == (2, 4, 1, 1), out.shape
    assert jnp.allclose(out, ref, atol=1e-5, rtol=1e-5), "mismatch vs reference"

    # Exercise the tiled-reduction path: spatial not a multiple of TS (tail
    # mask) and rows not a multiple of TM (padded row tile).
    x2 = jax.random.normal(jax.random.PRNGKey(1), (3, 4, 13, 21), dtype=jnp.float32)
    out2 = global_average_pool(x2, tm=8, ts=128)
    jax.block_until_ready(out2)
    ref2 = jnp.mean(x2, axis=(2, 3), keepdims=True)
    assert out2.shape == (3, 4, 1, 1), out2.shape
    assert jnp.allclose(out2, ref2, atol=1e-5, rtol=1e-5), "mismatch (tiled path)"

    # bf16 input path (f32 accumulation inside the kernel).
    x3 = jax.random.normal(jax.random.PRNGKey(2), (2, 4, 16, 16), dtype=jnp.bfloat16)
    out3 = global_average_pool(x3)
    jax.block_until_ready(out3)
    ref3 = jnp.mean(x3.astype(jnp.float32), axis=(2, 3), keepdims=True)
    assert jnp.allclose(out3.astype(jnp.float32), ref3, atol=1e-2, rtol=1e-2), \
        "mismatch (bf16 path)"

    # 5-D input (N, C, D, H, W): mean over all trailing spatial dims.
    x4 = jax.random.normal(jax.random.PRNGKey(3), (2, 3, 4, 8, 8), dtype=jnp.float32)
    out4 = global_average_pool(x4)
    jax.block_until_ready(out4)
    ref4 = jnp.mean(x4, axis=(2, 3, 4), keepdims=True)
    assert out4.shape == (2, 3, 1, 1, 1), out4.shape
    assert jnp.allclose(out4, ref4, atol=1e-5, rtol=1e-5), "mismatch (5-D path)"

    print("KERNEL_OK")
</pallas_src>

<mosaic_0001>
module attributes {stable_mosaic.version = 11 : i64} {
  func.func @_gap_kernel_single(%arg0: i32, %arg1: memref<8x256xf32, #tpu.memory_space<vmem>>, %arg2: memref<8x1xf32, #tpu.memory_space<vmem>>) attributes {dimension_semantics = [#tpu.dimension_semantics<parallel>], iteration_bounds = array<i64: 1>, scalar_prefetch = 0 : i64, scratch_operands = 0 : i64, tpu.core_type = #tpu.core_type<tc>, window_params = [{transform_indices = @transform_0, window_bounds = array<i64: 8, 256>}, {transform_indices = @transform_1, window_bounds = array<i64: 8, 1>}]} {
    %c0 = arith.constant 0 : index
    %c0_0 = arith.constant 0 : index
    %0 = vector.load %arg1[%c0, %c0_0] : memref<8x256xf32, #tpu.memory_space<vmem>>, vector<8x256xf32>
    %cst = arith.constant dense<0.000000e+00> : vector<8xf32>
    %1 = vector.multi_reduction <add>, %0, %cst [1] : vector<8x256xf32> to vector<8xf32>
    %2 = vector.shape_cast %1 : vector<8xf32> to vector<8x1xf32>
    %cst_1 = arith.constant 3.906250e-03 : f32
    %3 = vector.broadcast %cst_1 : f32 to vector<8x1xf32>
    %4 = arith.mulf %2, %3 : vector<8x1xf32>
    %c0_2 = arith.constant 0 : index
    %c0_3 = arith.constant 0 : index
    %5 = vector.load %arg2[%c0_2, %c0_3] : memref<8x1xf32, #tpu.memory_space<vmem>>, vector<8x1xf32>
    tpu.vector_store %arg2[%c0_2, %c0_3], %4 {strides = array<i32>} : memref<8x1xf32, #tpu.memory_space<vmem>>, vector<8x1xf32>,
    return
  }
  func.func @transform_0(%arg0: i32) -> (i32, i32) {
    %c0_i32 = arith.constant 0 : i32
    %c0_i32_0 = arith.constant 0 : i32
    return %arg0, %c0_i32 : i32, i32
  }
  func.func @transform_1(%arg0: i32) -> (i32, i32) {
    %c0_i32 = arith.constant 0 : i32
    %c0_i32_0 = arith.constant 0 : i32
    return %arg0, %c0_i32 : i32, i32
  }
}

</mosaic_0001>

<llo_original>
// kernel: tpu_custom_call.1
$region0: #{tpu_custom_call.1}
  #allocation0 [shape = 'u32[]', space=smem, size = 0x4, offset = 0x4, fixed_abs, tag = 'smem constant byte address 0x4 - core index']
  #allocation1 [shape = 'u32[144,128]{1,0:T(1,128)}', space=vmem, size = 0x12000, scoped, tag = 'internal scratch']
  %s0 = inlined_call_operand.hbm [shape: f32[8,256], index: 0, kind: input, shape index: {}]
  %s1 = inlined_call_operand.vmem [shape: f32[8,1], index: 1, kind: output, shape index: {}]
  %s2 = sld [smem:[#allocation0]]
  $region18: #{tpu_custom_call.1} parent=0
    _
  %s4 = ssub.s32 1, %s2
  %s5 = scalar_select 0, %s4, %s2
  $region1: #{tpu_custom_call.1} parent=0
    #allocation2 [shape = 'u8[8192]{0}', space=vmem, size = 0x2000, scoped, tag = 'input window, operand 0, single buffered']
    #allocation3 [shape = 's32[1]{0}', space=sflag, size = 0x4, scoped, tag = 'scoped memory for tpu_custom_call.1']
    %6 = vsyncpa [#allocation3], 0
    // Predicated region
    $region2: #{tpu_custom_call.1} parent=1 // pred_check
      _
    $region3: #{tpu_custom_call.1} parent=1 // pred_check_branch
      %8 = sbr.rel (0) target = $region5
    $region4: #{tpu_custom_call.1} parent=1 // pred_region
      %s10 = ssub.s32 256, 256
      %11 = vsyncadd [#allocation3], %s10
      %s13 = sshll.u32 [#allocation2], 4
      %s14 = int_to_ptr.vmem [resolvable:$true] %s13
      %16 = dma.hbm_to_vmem [thread:$0]  %s0, 256, %s14, [#allocation3]
    $region5: #{tpu_custom_call.1} parent=1 // pred_fallthru
      _
    // Predicated region
    $region6: #{tpu_custom_call.1} parent=1 // pred_check
      _
    $region7: #{tpu_custom_call.1} parent=1 // pred_check_branch
      %18 = sbr.rel (0) target = $region9
    $region8: #{tpu_custom_call.1} parent=1 // pred_region
      %19 = dma.done [#allocation3], 256
    $region9: #{tpu_custom_call.1} parent=1 // pred_fallthru
      _
    %v20 = vld [vmem:[#allocation2] sm:$0xff]
    %v21 = vld [vmem:[#allocation2 + $0x8] sm:$0xff]
    %v22 = vadd.f32 %v20, %v21
    %23 = vadd.xlane.f32.xlu0 %v22
    %v24 = vpop.xlane.xlu0 %23
    %v25 = vmul.f32 %v24, 0.00390625
    %vm26 = vcmask 7168
    %27 = vst.msk [vmem:[%s1] sm:$0xff] %vm26, %v25
    // Predicated region
    $region10: #{tpu_custom_call.1} parent=1 // pred_check
      _
    $region11: #{tpu_custom_call.1} parent=1 // pred_check_branch
      %29 = sbr.rel (0) target = $region13
    $region12: #{tpu_custom_call.1} parent=1 // pred_region
      _
    $region13: #{tpu_custom_call.1} parent=1 // pred_fallthru
      _
    // Predicated region
    $region14: #{tpu_custom_call.1} parent=1 // pred_check
      _
    $region15: #{tpu_custom_call.1} parent=1 // pred_check_branch
      %31 = sbr.rel (0) target = $region17
    $region16: #{tpu_custom_call.1} parent=1 // pred_region
      _
    $region17: #{tpu_custom_call.1} parent=1 // pred_fallthru
      _
    %32 = vsyncpa [#allocation3], 1

</llo_original>
